<compile_context>
chip_gen: v5e
topology: v5e:2x2
jax: 0.10.0
libtpu: 0.0.40
codegen_flags: <defaults>
</compile_context>

<pallas_src>
import numpy as np
import jax
import jax.numpy as jnp
from jax.experimental import pallas as pl
from jax.experimental.pallas import tpu as pltpu

# ------------------------- config (small, consistent with the module) -------
HIDDEN = 32
SEQ = 8
BATCH = 2
EPS = 1e-12      # BertLayerNorm eps


# ------------------------- Pallas kernel ------------------------------------
def _self_output_kernel(x_ref, res_ref, w_ref, b_ref, g_ref, beta_ref, out_ref):
    """Fused BertSelfOutput for all B*S rows at once.

    x_ref/res_ref/out_ref: (R, H) with R = B*S (batch folded into sublanes)
    w_ref: (H, H), b_ref/g_ref/beta_ref: (1, H)
    """
    x = x_ref[...]                                                   # (R, H)
    # dense
    h = jnp.dot(x, w_ref[...], preferred_element_type=jnp.float32) + b_ref[...]
    # dropout is identity (eval / p effectively 0)
    # residual add
    h = h + res_ref[...]
    # LayerNorm: single-pass variance + rsqrt (EUP-friendly)
    mu = jnp.mean(h, axis=-1, keepdims=True)
    var = jnp.mean(h * h, axis=-1, keepdims=True) - mu * mu
    inv = jax.lax.rsqrt(var + EPS)
    out_ref[...] = ((h - mu) * inv) * g_ref[...] + beta_ref[...]     # single store


# ------------------------- wrapper -------------------------------------------
def bert_self_output(hidden_states, input_tensor, w, b, gamma, beta):
    """hidden_states, input_tensor: (B, S, H); w: (H, H); b/gamma/beta: (1, H)."""
    B, S, H = hidden_states.shape
    x = hidden_states.reshape(B * S, H)      # fold batch into sublane axis
    res = input_tensor.reshape(B * S, H)
    vmem = pl.BlockSpec(memory_space=pltpu.MemorySpace.VMEM)
    out = pl.pallas_call(
        _self_output_kernel,
        out_shape=jax.ShapeDtypeStruct((B * S, H), jnp.float32),
        in_specs=[vmem, vmem, vmem, vmem, vmem, vmem],
        out_specs=vmem,
    )(x, res, w, b, gamma, beta)
    return out.reshape(B, S, H)


# ------------------------- pure-JAX reference --------------------------------
def bert_self_output_ref(hidden_states, input_tensor, w, b, gamma, beta):
    h = hidden_states @ w + b               # dense
    h = h + input_tensor                    # residual (dropout is identity)
    mu = h.mean(-1, keepdims=True)
    var = ((h - mu) ** 2).mean(-1, keepdims=True)
    return (h - mu) / jnp.sqrt(var + EPS) * gamma + beta


# ------------------------- main ----------------------------------------------
if __name__ == "__main__":
    key = jax.random.PRNGKey(0)
    kh, ki, kw, kb, kg, kbe = jax.random.split(key, 6)

    hidden_states = jax.random.normal(kh, (BATCH, SEQ, HIDDEN), jnp.float32)
    input_tensor = jax.random.normal(ki, (BATCH, SEQ, HIDDEN), jnp.float32)

    w = jax.random.normal(kw, (HIDDEN, HIDDEN), jnp.float32) * 0.02
    b = jax.random.normal(kb, (1, HIDDEN), jnp.float32) * 0.02
    gamma = 1.0 + jax.random.normal(kg, (1, HIDDEN), jnp.float32) * 0.02
    beta = jax.random.normal(kbe, (1, HIDDEN), jnp.float32) * 0.02

    out = bert_self_output(hidden_states, input_tensor, w, b, gamma, beta)
    out = jax.block_until_ready(out)

    ref = bert_self_output_ref(hidden_states, input_tensor, w, b, gamma, beta)
    np.testing.assert_allclose(np.asarray(out), np.asarray(ref),
                               rtol=1e-4, atol=1e-4)
    print("KERNEL_OK")
</pallas_src>

<mosaic_0001>
module attributes {stable_mosaic.version = 11 : i64} {
  func.func @_self_output_kernel(%arg0: memref<16x32xf32, #tpu.memory_space<vmem>>, %arg1: memref<16x32xf32, #tpu.memory_space<vmem>>, %arg2: memref<32x32xf32, #tpu.memory_space<vmem>>, %arg3: memref<1x32xf32, #tpu.memory_space<vmem>>, %arg4: memref<1x32xf32, #tpu.memory_space<vmem>>, %arg5: memref<1x32xf32, #tpu.memory_space<vmem>>, %arg6: memref<16x32xf32, #tpu.memory_space<vmem>>) attributes {dimension_semantics = [], scalar_prefetch = 0 : i64, scratch_operands = 0 : i64, tpu.core_type = #tpu.core_type<tc>} {
    %c0 = arith.constant 0 : index
    %c0_0 = arith.constant 0 : index
    %0 = vector.load %arg0[%c0, %c0_0] : memref<16x32xf32, #tpu.memory_space<vmem>>, vector<16x32xf32>
    %c0_1 = arith.constant 0 : index
    %c0_2 = arith.constant 0 : index
    %1 = vector.load %arg2[%c0_1, %c0_2] : memref<32x32xf32, #tpu.memory_space<vmem>>, vector<32x32xf32>
    %cst = arith.constant dense<0.000000e+00> : vector<16x32xf32>
    %2 = tpu.matmul %0, %1, %cst {dimension_numbers = #tpu.dot_dimension_numbers<[1], [0], [0], [1], [0, 0, 1, 1], [], []>} : vector<16x32xf32>, vector<32x32xf32>, vector<16x32xf32> -> vector<16x32xf32>
    %c0_3 = arith.constant 0 : index
    %c0_4 = arith.constant 0 : index
    %3 = vector.load %arg3[%c0_3, %c0_4] : memref<1x32xf32, #tpu.memory_space<vmem>>, vector<1x32xf32>
    %4 = vector.broadcast %3 : vector<1x32xf32> to vector<16x32xf32>
    %5 = arith.addf %2, %4 : vector<16x32xf32>
    %c0_5 = arith.constant 0 : index
    %c0_6 = arith.constant 0 : index
    %6 = vector.load %arg1[%c0_5, %c0_6] : memref<16x32xf32, #tpu.memory_space<vmem>>, vector<16x32xf32>
    %7 = arith.addf %5, %6 : vector<16x32xf32>
    %cst_7 = arith.constant dense<0.000000e+00> : vector<16xf32>
    %8 = vector.multi_reduction <add>, %7, %cst_7 [1] : vector<16x32xf32> to vector<16xf32>
    %9 = vector.shape_cast %8 : vector<16xf32> to vector<16x1xf32>
    %cst_8 = arith.constant 3.200000e+01 : f32
    %10 = vector.broadcast %cst_8 : f32 to vector<16x1xf32>
    %11 = arith.divf %9, %10 : vector<16x1xf32>
    %12 = arith.mulf %7, %7 : vector<16x32xf32>
    %cst_9 = arith.constant dense<0.000000e+00> : vector<16xf32>
    %13 = vector.multi_reduction <add>, %12, %cst_9 [1] : vector<16x32xf32> to vector<16xf32>
    %14 = vector.shape_cast %13 : vector<16xf32> to vector<16x1xf32>
    %cst_10 = arith.constant 3.200000e+01 : f32
    %15 = vector.broadcast %cst_10 : f32 to vector<16x1xf32>
    %16 = arith.divf %14, %15 : vector<16x1xf32>
    %17 = arith.mulf %11, %11 : vector<16x1xf32>
    %18 = arith.subf %16, %17 : vector<16x1xf32>
    %cst_11 = arith.constant 9.99999996E-13 : f32
    %19 = vector.broadcast %cst_11 : f32 to vector<16x1xf32>
    %20 = arith.addf %18, %19 : vector<16x1xf32>
    %21 = math.rsqrt %20 : vector<16x1xf32>
    %22 = vector.broadcast %11 : vector<16x1xf32> to vector<16x32xf32>
    %23 = arith.subf %7, %22 : vector<16x32xf32>
    %24 = vector.broadcast %21 : vector<16x1xf32> to vector<16x32xf32>
    %25 = arith.mulf %23, %24 : vector<16x32xf32>
    %c0_12 = arith.constant 0 : index
    %c0_13 = arith.constant 0 : index
    %26 = vector.load %arg4[%c0_12, %c0_13] : memref<1x32xf32, #tpu.memory_space<vmem>>, vector<1x32xf32>
    %27 = vector.broadcast %26 : vector<1x32xf32> to vector<16x32xf32>
    %28 = arith.mulf %25, %27 : vector<16x32xf32>
    %c0_14 = arith.constant 0 : index
    %c0_15 = arith.constant 0 : index
    %29 = vector.load %arg5[%c0_14, %c0_15] : memref<1x32xf32, #tpu.memory_space<vmem>>, vector<1x32xf32>
    %30 = vector.broadcast %29 : vector<1x32xf32> to vector<16x32xf32>
    %31 = arith.addf %28, %30 : vector<16x32xf32>
    %c0_16 = arith.constant 0 : index
    %c0_17 = arith.constant 0 : index
    %32 = vector.load %arg6[%c0_16, %c0_17] : memref<16x32xf32, #tpu.memory_space<vmem>>, vector<16x32xf32>
    tpu.vector_store %arg6[%c0_16, %c0_17], %31 {strides = array<i32>} : memref<16x32xf32, #tpu.memory_space<vmem>>, vector<16x32xf32>,
    return
  }
}

</mosaic_0001>

<llo_original>
// kernel: tpu_custom_call.1
$region0: #{tpu_custom_call.1}
  #allocation0 [shape = 'u32[]', space=smem, size = 0x4, offset = 0x4, fixed_abs, tag = 'smem constant byte address 0x4 - core index']
  #allocation1 [shape = 'u32[72,128]{1,0:T(1,128)}', space=vmem, size = 0x9000, scoped, tag = 'internal scratch']
  %s0 = inlined_call_operand.hbm [shape: f32[16,32], index: 0, kind: input, shape index: {}]
  %s1 = inlined_call_operand.hbm [shape: f32[16,32], index: 1, kind: input, shape index: {}]
  %s2 = inlined_call_operand.hbm [shape: f32[32,32], index: 2, kind: input, shape index: {}]
  %s3 = inlined_call_operand.vmem [shape: f32[1,32], index: 3, kind: input, shape index: {}]
  %s4 = inlined_call_operand.vmem [shape: f32[1,32], index: 4, kind: input, shape index: {}]
  %s5 = inlined_call_operand.vmem [shape: f32[1,32], index: 5, kind: input, shape index: {}]
  %s6 = inlined_call_operand.hbm [shape: f32[16,32], index: 6, kind: output, shape index: {}]
  %s7 = sld [smem:[#allocation0]]
  $region46: #{tpu_custom_call.1} parent=0
    _
  %s9 = ssub.s32 1, %s7
  %s10 = scalar_select 0, %s9, %s7
  $region1: #{tpu_custom_call.1} parent=0
    #allocation2 [shape = 'u8[8192]{0}', space=vmem, size = 0x2000, scoped, tag = 'input window, operand 0, single buffered']
    #allocation3 [shape = 's32[1]{0}', space=sflag, size = 0x4, scoped, tag = 'scoped memory for tpu_custom_call.1']
    #allocation4 [shape = 's32[1]{0}', space=sflag, size = 0x4, scoped, tag = 'scoped memory for tpu_custom_call.1']
    #allocation5 [shape = 'u8[8192]{0}', space=vmem, size = 0x2000, scoped, tag = 'input window, operand 1, single buffered']
    #allocation6 [shape = 's32[1]{0}', space=sflag, size = 0x4, scoped, tag = 'scoped memory for tpu_custom_call.1']
    #allocation7 [shape = 'u8[16384]{0}', space=vmem, size = 0x4000, scoped, tag = 'input window, operand 2, single buffered']
    #allocation8 [shape = 'u8[8192]{0}', space=vmem, size = 0x2000, scoped, tag = 'output window, operand 0, single buffered']
    %11 = vsyncpa [#allocation3], 0
    %12 = vsyncpa [#allocation6], 0
    %13 = vsyncpa [#allocation4], 0
    // Predicated region
    $region2: #{tpu_custom_call.1} parent=1 // pred_check
      _
    $region3: #{tpu_custom_call.1} parent=1 // pred_check_branch
      %15 = sbr.rel (0) target = $region5
    $region4: #{tpu_custom_call.1} parent=1 // pred_region
      %17 = vsyncadd [#allocation3], 0
      %s18 = sshll.u32 %s0, 4
      %s19 = int_to_ptr.hbm [resolvable:$true] %s18
      %s20 = sshll.u32 [#allocation2], 4
      %s21 = int_to_ptr.vmem [resolvable:$true] %s20
      %26 = dma.hbm_to_vmem [thread:$0]  %s19, 256, %s21, [#allocation3], 128, 128, 8
    $region5: #{tpu_custom_call.1} parent=1 // pred_fallthru
      _
    // Predicated region
    $region6: #{tpu_custom_call.1} parent=1 // pred_check
      _
    $region7: #{tpu_custom_call.1} parent=1 // pred_check_branch
      %28 = sbr.rel (0) target = $region9
    $region8: #{tpu_custom_call.1} parent=1 // pred_region
      %30 = vsyncadd [#allocation6], 0
      %s31 = sshll.u32 %s1, 4
      %s32 = int_to_ptr.hbm [resolvable:$true] %s31
      %s33 = sshll.u32 [#allocation5], 4
      %s34 = int_to_ptr.vmem [resolvable:$true] %s33
      %39 = dma.hbm_to_vmem [thread:$0]  %s32, 256, %s34, [#allocation6], 128, 128, 8
    $region9: #{tpu_custom_call.1} parent=1 // pred_fallthru
      _
    // Predicated region
    $region10: #{tpu_custom_call.1} parent=1 // pred_check
      _
    $region11: #{tpu_custom_call.1} parent=1 // pred_check_branch
      %41 = sbr.rel (0) target = $region13
    $region12: #{tpu_custom_call.1} parent=1 // pred_region
      %43 = vsyncadd [#allocation6], 0
      %s44 = sshll.u32 %s2, 4
      %s45 = int_to_ptr.hbm [resolvable:$true] %s44
      %s46 = sshll.u32 [#allocation7], 4
      %s47 = int_to_ptr.vmem [resolvable:$true] %s46
      %52 = dma.hbm_to_vmem [thread:$0]  %s45, 512, %s47, [#allocation6], 128, 128, 8
    $region13: #{tpu_custom_call.1} parent=1 // pred_fallthru
      _
    // Predicated region
    $region14: #{tpu_custom_call.1} parent=1 // pred_check
      _
    $region15: #{tpu_custom_call.1} parent=1 // pred_check_branch
      %54 = sbr.rel (0) target = $region17
    $region16: #{tpu_custom_call.1} parent=1 // pred_region
      _
    $region17: #{tpu_custom_call.1} parent=1 // pred_fallthru
      _
    // Predicated region
    $region18: #{tpu_custom_call.1} parent=1 // pred_check
      _
    $region19: #{tpu_custom_call.1} parent=1 // pred_check_branch
      %56 = sbr.rel (0) target = $region21
    $region20: #{tpu_custom_call.1} parent=1 // pred_region
      _
    $region21: #{tpu_custom_call.1} parent=1 // pred_fallthru
      _
    // Predicated region
    $region22: #{tpu_custom_call.1} parent=1 // pred_check
      _
    $region23: #{tpu_custom_call.1} parent=1 // pred_check_branch
      %58 = sbr.rel (0) target = $region25
    $region24: #{tpu_custom_call.1} parent=1 // pred_region
      _
    $region25: #{tpu_custom_call.1} parent=1 // pred_fallthru
      _
    // Predicated region
    $region26: #{tpu_custom_call.1} parent=1 // pred_check
      _
    $region27: #{tpu_custom_call.1} parent=1 // pred_check_branch
      %60 = sbr.rel (0) target = $region29
    $region28: #{tpu_custom_call.1} parent=1 // pred_region
      %62 = dma.done [#allocation3], 256
    $region29: #{tpu_custom_call.1} parent=1 // pred_fallthru
      _
    // Predicated region
    $region30: #{tpu_custom_call.1} parent=1 // pred_check
      _
    $region31: #{tpu_custom_call.1} parent=1 // pred_check_branch
      %64 = sbr.rel (0) target = $region33
    $region32: #{tpu_custom_call.1} parent=1 // pred_region
      %66 = dma.done [#allocation6], 256
    $region33: #{tpu_custom_call.1} parent=1 // pred_fallthru
      _
    // Predicated region
    $region34: #{tpu_custom_call.1} parent=1 // pred_check
      _
    $region35: #{tpu_custom_call.1} parent=1 // pred_check_branch
      %68 = sbr.rel (0) target = $region37
    $region36: #{tpu_custom_call.1} parent=1 // pred_region
      %70 = dma.done [#allocation6], 512
    $region37: #{tpu_custom_call.1} parent=1 // pred_fallthru
      _
    %v71 = vld [vmem:[#allocation2] sm:$0xff]
    %v72 = vld [vmem:[#allocation2 + $0x8] sm:$0xff]
    %v73 = vld [vmem:[#allocation7] sm:$0xff]
    %v74 = vld [vmem:[#allocation7 + $0x8] sm:$0xff]
    %v75 = vld [vmem:[#allocation7 + $0x10] sm:$0xff]
    %v76 = vld [vmem:[#allocation7 + $0x18] sm:$0xff]
    %v77 = vld [vmem:[%s3] sm:$0x1]
    %v79 = vperm.slane %v77, 0
    %vm81 = vcmask 261120
    %v83 = vsel %vm81, %v71, 0
    %v86 = vsel %vm81, %v72, 0
    %88 = vmatpush.msra.mxu0 0.0
    %89 = vmatpush.msra.mxu0 0.0
    %90 = vmatpush.msra.mxu0 0.0
    %91 = vmatpush.msra.mxu0 0.0
    %92 = vmatpush.msra.mxu0 0.0
    %93 = vmatpush.msra.mxu0 0.0
    %94 = vmatpush.msra.mxu0 0.0
    %95 = vmatpush.msra.mxu0 0.0
    %96 = vmatpush.msra.mxu0 0.0
    %97 = vmatpush.msra.mxu0 0.0
    %98 = vmatpush.msra.mxu0 0.0
    %99 = vmatpush.msra.mxu0 0.0
    %100 = vmatpush.msra.mxu0 %v76
    %101 = vmatpush.msra.mxu0 %v75
    %102 = vmatpush.msra.mxu0 %v74
    %103 = vmatpush.msra.mxu0 %v73
    %104 = vmatmul.f32.gmra.mxu0 %v83
    %v105 = vpop.f32.mrf.mxu0
    %v106 = vadd.f32 %v79, %v105
    %107 = vmatmul.f32.gmra.mxu0 %v86
    %v108 = vpop.f32.mrf.mxu0
    %v109 = vadd.f32 %v79, %v108
    %110 = vdwg.mxu0
    %v111 = vld [vmem:[#allocation5] sm:$0xff]
    %v112 = vld [vmem:[#allocation5 + $0x8] sm:$0xff]
    %v113 = vadd.f32 %v106, %v111
    %v114 = vadd.f32 %v109, %v112
    %v115 = vsel %vm81, %v113, 0.0
    %116 = vadd.xlane.f32.xlu0 %v115
    %v117 = vpop.xlane.xlu0 %116
    %v118 = vsel %vm81, %v114, 0.0
    %119 = vadd.xlane.f32.xlu0 %v118
    %v120 = vpop.xlane.xlu0 %119
    %v121 = vrcp.pop 32.0
    %v122 = vmul.f32 32.0, %v121
    %v123 = vsub.f32 1.0, %v122
    %v124 = vmul.f32 %v121, %v123
    %v125 = vadd.f32 %v121, %v124
    %vm126 = vweird.f32 %v121
    %v127 = vsel %vm126, %v121, %v125
    %v128 = vmul.f32 %v117, %v127
    %v129 = vmul.f32 %v120, %v127
    %v130 = vmul.f32 %v113, %v113
    %v131 = vmul.f32 %v114, %v114
    %v132 = vsel %vm81, %v130, 0.0
    %133 = vadd.xlane.f32.xlu0 %v132
    %v134 = vpop.xlane.xlu0 %133
    %v135 = vsel %vm81, %v131, 0.0
    %136 = vadd.xlane.f32.xlu0 %v135
    %v137 = vpop.xlane.xlu0 %136
    %v138 = vmul.f32 %v134, %v127
    %v139 = vmul.f32 %v137, %v127
    %v140 = vmul.f32 %v128, %v128
    %v141 = vmul.f32 %v129, %v129
    %v142 = vsub.f32 %v138, %v140
    %v143 = vsub.f32 %v139, %v141
    %v144 = vadd.f32 %v142, 1e-12
    %v145 = vadd.f32 %v143, 1e-12
    %v146 = vrsqrt.pop %v144
    %v147 = vmul.f32 %v146, %v144
    %v148 = vmul.f32 %v147, %v146
    %v149 = vmul.f32 0.5, %v148
    %v150 = vsub.f32 1.5, %v149
    %v151 = vmul.f32 %v146, %v150
    %vm152 = vweird.f32 %v144
    %vm153 = vweird.f32 %v146
    %vm154 = vmor %vm152, %vm153
    %v155 = vsel %vm154, %v146, %v151
    %v156 = vrsqrt.pop %v145
    %v157 = vmul.f32 %v156, %v145
    %v158 = vmul.f32 %v157, %v156
    %v159 = vmul.f32 0.5, %v158
    %v160 = vsub.f32 1.5, %v159
    %v161 = vmul.f32 %v156, %v160
    %vm162 = vweird.f32 %v145
    %vm163 = vweird.f32 %v156
    %vm164 = vmor %vm162, %vm163
    %v165 = vsel %vm164, %v156, %v161
    %v166 = vsub.f32 %v113, %v128
    %v167 = vsub.f32 %v114, %v129
    %v168 = vmul.f32 %v166, %v155
    %v169 = vmul.f32 %v167, %v165
    %v170 = vld [vmem:[%s4] sm:$0x1]
    %v172 = vperm.slane %v170, 0
    %v174 = vmul.f32 %v168, %v172
    %v175 = vmul.f32 %v169, %v172
    %v176 = vld [vmem:[%s5] sm:$0x1]
    %v178 = vperm.slane %v176, 0
    %v180 = vadd.f32 %v174, %v178
    %v181 = vadd.f32 %v175, %v178
    %182 = vst.msk [vmem:[#allocation8] sm:$0xff] %vm81, %v180
    %183 = vst.msk [vmem:[#allocation8 + $0x8] sm:$0xff] %vm81, %v181
    // Predicated region
    $region38: #{tpu_custom_call.1} parent=1 // pred_check
      _
    $region39: #{tpu_custom_call.1} parent=1 // pred_check_branch
      %185 = sbr.rel (0) target = $region41
    $region40: #{tpu_custom_call.1} parent=1 // pred_region
      %187 = vsyncadd [#allocation4], 0
      %s188 = sshll.u32 [#allocation8], 4
      %s189 = int_to_ptr.vmem [resolvable:$true] %s188
      %s190 = sshll.u32 %s6, 4
      %s191 = int_to_ptr.hbm [resolvable:$true] %s190
      %196 = dma.vmem_to_hbm [thread:$0]  %s189, 256, %s191, [#allocation4], 128, 128, 8
    $region41: #{tpu_custom_call.1} parent=1 // pred_fallthru
      _
    // Predicated region
    $region42: #{tpu_custom_call.1} parent=1 // pred_check
      _
    $region43: #{tpu_custom_call.1} parent=1 // pred_check_branch
      %198 = sbr.rel (0) target = $region45
    $region44: #{tpu_custom_call.1} parent=1 // pred_region
      %200 = dma.done [#allocation4], 256
    $region45: #{tpu_custom_call.1} parent=1 // pred_fallthru
      _
    %201 = vsyncpa [#allocation3], 1
    %202 = vsyncpa [#allocation6], 1
    %203 = vsyncpa [#allocation4], 1

</llo_original>
